<compile_context>
chip_gen: v7x
topology: tpu7x:2x2x1
jax: 0.10.0
libtpu: 0.0.40
codegen_flags: <defaults>
</compile_context>

<pallas_src>
import functools
import math

import jax
import jax.numpy as jnp
from jax.experimental import pallas as pl
from jax.experimental.pallas import tpu as pltpu


def make_positional_encoding_table(d_model, max_len=5000, dtype=jnp.float32):
    """Equivalent of the registered buffer `pe`: shape [max_len, 1, d_model]."""
    position = jnp.arange(max_len, dtype=jnp.float32)[:, None]              # [L, 1]
    div_term = jnp.exp(jnp.arange(0, d_model, 2, dtype=jnp.float32)
                       * (-math.log(10000.0) / d_model))                    # [D/2]
    pe = jnp.zeros((max_len, d_model), jnp.float32)
    pe = pe.at[:, 0::2].set(jnp.sin(position * div_term))
    pe = pe.at[:, 1::2].set(jnp.cos(position * div_term))
    return pe.astype(dtype)[:, None, :]                                     # [L, 1, D]


def _round_up(n, m):
    return ((n + m - 1) // m) * m


def _pos_enc_eval_kernel(x_ref, pe_ref, o_ref):
    """Eval mode: y = x + pe.  x_ref/o_ref: [ts, B, D], pe_ref: [ts, 1, D]."""
    o_ref[...] = x_ref[...] + pe_ref[...]          # VPU add, sublane-bcast over B


def _pos_enc_train_kernel(seed_ref, x_ref, pe_ref, o_ref, *, keep_thresh, inv_keep):
    """Training mode: inverted dropout on (x + pe) via the on-chip PRNG.

    seed_ref : SMEM int32[1]  (scalar prefetch)
    x_ref    : VMEM [ts, B, D]
    pe_ref   : VMEM [ts, 1, D]
    o_ref    : VMEM [ts, B, D]
    """
    y = x_ref[...] + pe_ref[...]
    # Independent, decorrelated stream per grid tile (seed words are hashed).
    pltpu.prng_seed(seed_ref[0], pl.program_id(0))
    bits = pltpu.bitcast(pltpu.prng_random_bits(y.shape), jnp.int32)
    r = bits & jnp.int32(0x7FFFFFFF)               # uniform 31-bit, non-negative
    keep = r >= jnp.int32(keep_thresh)             # P(keep) = 1 - p
    o_ref[...] = jnp.where(keep, y * inv_keep, 0.0).astype(o_ref.dtype)


def positional_encoding_forward(x, pe_table, *, dropout_p=0.1,
                                deterministic=True, seed=0):
    """Pallas forward: y = dropout(x + pe[:S]), x shaped [S, B, D]."""
    S, B, D = x.shape
    if pe_table.ndim == 2:                         # accept a squeezed [L, D] table
        pe_table = pe_table[:, None, :]
    L = pe_table.shape[0]
    assert S <= L, "sequence longer than max_len"
    assert pe_table.shape == (L, 1, D)
    # One-time buffer conversion (no-op when dtypes already match).
    if pe_table.dtype != x.dtype:
        pe_table = pe_table.astype(x.dtype)

    p = float(dropout_p)
    if (not deterministic) and p >= 1.0:           # torch: everything dropped
        return jnp.zeros_like(x)
    train = (not deterministic) and p > 0.0

    # ---- sequence-tile size --------------------------------------------------
    # Budget ~12 MiB per pipeline stage (x block + out block + pe block, the pe
    # block counted with its 8-sublane / 128-lane VMEM padding).  With double
    # buffering that is <= ~24 MiB: inside v7x's 64 MiB physical VMEM and well
    # inside v5e/v6e's 128 MiB once vmem_limit_bytes is raised to match.
    itemsize = x.dtype.itemsize
    bytes_per_row = 2 * B * D * itemsize + 8 * _round_up(D, 128) * itemsize
    ts = min(S, 2048, max(1, (12 << 20) // bytes_per_row))
    if S > 8:
        ts = min(ts, pl.cdiv(S, 2))                # >=2 grid steps -> both v7x TCs work
        ts = max(8, (ts // 8) * 8)                 # 8-aligned tiles, no ragged sublane tail
    grid = (pl.cdiv(S, ts),)

    block_bytes = ts * bytes_per_row
    vmem_limit = int(min(96 << 20, max(32 << 20, 4 * block_bytes)))
    compiler_params = pltpu.CompilerParams(
        dimension_semantics=("parallel",),         # v7x: split seq tiles across 2 TCs
        vmem_limit_bytes=vmem_limit)

    io_bytes = (2 * S * B * D * itemsize           # x in + y out
                + S * D * itemsize)                # pe in
    cost = pl.CostEstimate(flops=S * B * D, transcendentals=0,
                           bytes_accessed=io_bytes)

    out_shape = jax.ShapeDtypeStruct((S, B, D), x.dtype)
    x_block = (ts, B, D)
    pe_block = (ts, 1, D)

    if not train:
        # Eval / inference path: no seed, no scalar prefetch, no PRNG.
        return pl.pallas_call(
            _pos_enc_eval_kernel,
            out_shape=out_shape,
            grid=grid,
            in_specs=[pl.BlockSpec(x_block, lambda i: (i, 0, 0)),
                      pl.BlockSpec(pe_block, lambda i: (i, 0, 0))],
            out_specs=pl.BlockSpec(x_block, lambda i: (i, 0, 0)),
            compiler_params=compiler_params,
            cost_estimate=cost,
        )(x, pe_table)

    keep_thresh = min(int(round(p * float(1 << 31))), (1 << 31) - 1)
    kernel = functools.partial(_pos_enc_train_kernel,
                               keep_thresh=keep_thresh,
                               inv_keep=1.0 / (1.0 - p))
    seed_arr = jnp.asarray([seed], dtype=jnp.int32)
    return pl.pallas_call(
        kernel,
        out_shape=out_shape,
        grid_spec=pltpu.PrefetchScalarGridSpec(
            num_scalar_prefetch=1,
            grid=grid,
            in_specs=[pl.BlockSpec(x_block, lambda i, seed: (i, 0, 0)),
                      pl.BlockSpec(pe_block, lambda i, seed: (i, 0, 0))],
            out_specs=pl.BlockSpec(x_block, lambda i, seed: (i, 0, 0)),
        ),
        compiler_params=compiler_params,
        cost_estimate=cost,
    )(seed_arr, x, pe_table)


if __name__ == "__main__":
    # Small shapes consistent with the module: seq=8, batch=2, d_model=32.
    S, B, D = 8, 2, 32
    dropout_p = 0.1

    key = jax.random.PRNGKey(0)
    x = jax.random.normal(key, (S, B, D), dtype=jnp.float32)
    pe_table = make_positional_encoding_table(D, max_len=5000)   # [L, 1, D]

    # Eval mode (dropout = identity): must match the plain-JAX reference.
    y = positional_encoding_forward(x, pe_table, dropout_p=dropout_p,
                                    deterministic=True)
    y = jax.block_until_ready(y)
    ref = x + pe_table[:S]                                       # broadcast over batch
    assert y.shape == (S, B, D)
    assert jnp.allclose(y, ref, atol=1e-6, rtol=1e-6)

    # Training mode exercises the on-chip PRNG, which only lowers on real TPU
    # hardware (no CPU/interpret rule) -> gate it on the backend.
    if jax.devices()[0].platform == "tpu":
        y_tr = positional_encoding_forward(x, pe_table, dropout_p=dropout_p,
                                           deterministic=False, seed=123)
        y_tr = jax.block_until_ready(y_tr)
        kept = y_tr != 0.0
        expected = jnp.where(kept, ref / (1.0 - dropout_p), 0.0)
        assert y_tr.shape == (S, B, D)
        assert jnp.allclose(jnp.where(kept, y_tr, 0.0), expected,
                            atol=1e-5, rtol=1e-5)
        drop_frac = 1.0 - float(jnp.mean(kept.astype(jnp.float32)))
        assert 0.0 <= drop_frac <= 0.5                           # loose sanity, p ~= 0.1

    print("KERNEL_OK")
</pallas_src>

<mosaic_0001>
module attributes {stable_mosaic.version = 11 : i64} {
  func.func @_pos_enc_eval_kernel(%arg0: i32, %arg1: memref<8x2x32xf32, #tpu.memory_space<vmem>>, %arg2: memref<8x1x32xf32, #tpu.memory_space<vmem>>, %arg3: memref<8x2x32xf32, #tpu.memory_space<vmem>>) attributes {dimension_semantics = [#tpu.dimension_semantics<parallel>], iteration_bounds = array<i64: 1>, scalar_prefetch = 0 : i64, scratch_operands = 0 : i64, tpu.core_type = #tpu.core_type<tc>, window_params = [{transform_indices = @transform_0, window_bounds = array<i64: 8, 2, 32>}, {transform_indices = @transform_1, window_bounds = array<i64: 8, 1, 32>}, {transform_indices = @transform_2, window_bounds = array<i64: 8, 2, 32>}]} {
    %c0 = arith.constant 0 : index
    %c0_0 = arith.constant 0 : index
    %c0_1 = arith.constant 0 : index
    %0 = vector.load %arg1[%c0, %c0_0, %c0_1] : memref<8x2x32xf32, #tpu.memory_space<vmem>>, vector<8x2x32xf32>
    %c0_2 = arith.constant 0 : index
    %c0_3 = arith.constant 0 : index
    %c0_4 = arith.constant 0 : index
    %1 = vector.load %arg2[%c0_2, %c0_3, %c0_4] : memref<8x1x32xf32, #tpu.memory_space<vmem>>, vector<8x1x32xf32>
    %2 = vector.broadcast %1 : vector<8x1x32xf32> to vector<8x2x32xf32>
    %3 = arith.addf %0, %2 : vector<8x2x32xf32>
    %c0_5 = arith.constant 0 : index
    %c0_6 = arith.constant 0 : index
    %c0_7 = arith.constant 0 : index
    %4 = vector.load %arg3[%c0_5, %c0_6, %c0_7] : memref<8x2x32xf32, #tpu.memory_space<vmem>>, vector<8x2x32xf32>
    tpu.vector_store %arg3[%c0_5, %c0_6, %c0_7], %3 {strides = array<i32>} : memref<8x2x32xf32, #tpu.memory_space<vmem>>, vector<8x2x32xf32>,
    return
  }
  func.func @transform_0(%arg0: i32) -> (i32, i32, i32) {
    %c0_i32 = arith.constant 0 : i32
    %c0_i32_0 = arith.constant 0 : i32
    %c0_i32_1 = arith.constant 0 : i32
    return %arg0, %c0_i32, %c0_i32_0 : i32, i32, i32
  }
  func.func @transform_1(%arg0: i32) -> (i32, i32, i32) {
    %c0_i32 = arith.constant 0 : i32
    %c0_i32_0 = arith.constant 0 : i32
    %c0_i32_1 = arith.constant 0 : i32
    return %arg0, %c0_i32, %c0_i32_0 : i32, i32, i32
  }
  func.func @transform_2(%arg0: i32) -> (i32, i32, i32) {
    %c0_i32 = arith.constant 0 : i32
    %c0_i32_0 = arith.constant 0 : i32
    %c0_i32_1 = arith.constant 0 : i32
    return %arg0, %c0_i32, %c0_i32_0 : i32, i32, i32
  }
}

</mosaic_0001>

<llo_original>
// kernel: tpu_custom_call.1
$region0: #{tpu_custom_call.1}
  #allocation0 [shape = 'u32[]', space=smem, size = 0x4, offset = 0x4, fixed_abs, tag = 'smem constant byte address 0x4 - core index']
  #allocation1 [shape = 'u32[144,128]{1,0:T(1,128)}', space=vmem, size = 0x12000, scoped, tag = 'internal scratch']
  %s0 = inlined_call_operand.vmem [shape: f32[8,2,32], index: 0, kind: input, shape index: {}]
  %s1 = inlined_call_operand.vmem [shape: f32[5000,1,32], index: 1, kind: input, shape index: {}]
  %s2 = inlined_call_operand.hbm [shape: f32[8,2,32], index: 2, kind: output, shape index: {}]
  %s3 = sld [smem:[#allocation0]]
  $region18: #{tpu_custom_call.1} parent=0
    _
  %s5 = ssub.s32 1, %s3
  %s6 = scalar_select 0, %s5, %s3
  $region1: #{tpu_custom_call.1} parent=0
    #allocation2 [shape = 'u8[8192]{0}', space=vmem, size = 0x2000, scoped, tag = 'output window, operand 0, single buffered']
    #allocation3 [shape = 's32[1]{0}', space=sflag, size = 0x4, scoped, tag = 'scoped memory for tpu_custom_call.1']
    %7 = vsyncpa [#allocation3], 0
    // Predicated region
    $region2: #{tpu_custom_call.1} parent=1 // pred_check
      _
    $region3: #{tpu_custom_call.1} parent=1 // pred_check_branch
      %9 = sbr.rel (0) target = $region5
    $region4: #{tpu_custom_call.1} parent=1 // pred_region
      _
    $region5: #{tpu_custom_call.1} parent=1 // pred_fallthru
      _
    // Predicated region
    $region6: #{tpu_custom_call.1} parent=1 // pred_check
      _
    $region7: #{tpu_custom_call.1} parent=1 // pred_check_branch
      %11 = sbr.rel (0) target = $region9
    $region8: #{tpu_custom_call.1} parent=1 // pred_region
      _
    $region9: #{tpu_custom_call.1} parent=1 // pred_fallthru
      _
    %v12 = vld [vmem:[%s0] sm:$0x3]
    %v13 = vld [vmem:[%s0 + $0x2] sm:$0x3]
    %v14 = vld [vmem:[%s0 + $0x4] sm:$0x3]
    %v15 = vld [vmem:[%s0 + $0x6] sm:$0x3]
    %v16 = vld [vmem:[%s0 + $0x8] sm:$0x3]
    %v17 = vld [vmem:[%s0 + $0xa] sm:$0x3]
    %v18 = vld [vmem:[%s0 + $0xc] sm:$0x3]
    %v19 = vld [vmem:[%s0 + $0xe] sm:$0x3]
    %v20 = vld [vmem:[%s1] sm:$0x1]
    %v21 = vld [vmem:[%s1 + $0x1] sm:$0x1]
    %v22 = vld [vmem:[%s1 + $0x2] sm:$0x1]
    %v23 = vld [vmem:[%s1 + $0x3] sm:$0x1]
    %v24 = vld [vmem:[%s1 + $0x4] sm:$0x1]
    %v25 = vld [vmem:[%s1 + $0x5] sm:$0x1]
    %v26 = vld [vmem:[%s1 + $0x6] sm:$0x1]
    %v27 = vld [vmem:[%s1 + $0x7] sm:$0x1]
    %v36 = vlaneseq
    %v37 = vshrl.u32 %v36, 7
    %v38 = vsub.s32 0, %v37
    %v39 = vrot.slane %v20, %v38
    %v40 = vlaneseq
    %v41 = vshrl.u32 %v40, 7
    %v42 = vsub.s32 0, %v41
    %v43 = vrot.slane %v21, %v42
    %v44 = vlaneseq
    %v45 = vshrl.u32 %v44, 7
    %v46 = vsub.s32 0, %v45
    %v47 = vrot.slane %v22, %v46
    %v48 = vlaneseq
    %v49 = vshrl.u32 %v48, 7
    %v50 = vsub.s32 0, %v49
    %v51 = vrot.slane %v23, %v50
    %v52 = vlaneseq
    %v53 = vshrl.u32 %v52, 7
    %v54 = vsub.s32 0, %v53
    %v55 = vrot.slane %v24, %v54
    %v56 = vlaneseq
    %v57 = vshrl.u32 %v56, 7
    %v58 = vsub.s32 0, %v57
    %v59 = vrot.slane %v25, %v58
    %v60 = vlaneseq
    %v61 = vshrl.u32 %v60, 7
    %v62 = vsub.s32 0, %v61
    %v63 = vrot.slane %v26, %v62
    %v64 = vlaneseq
    %v65 = vshrl.u32 %v64, 7
    %v66 = vsub.s32 0, %v65
    %v67 = vrot.slane %v27, %v66
    %v76 = vadd.f32 %v12, %v39
    %v77 = vadd.f32 %v13, %v43
    %v78 = vadd.f32 %v14, %v47
    %v79 = vadd.f32 %v15, %v51
    %v80 = vadd.f32 %v16, %v55
    %v81 = vadd.f32 %v17, %v59
    %v82 = vadd.f32 %v18, %v63
    %v83 = vadd.f32 %v19, %v67
    %vm84 = vcmask 254976
    %85 = vst.msk [vmem:[#allocation2] sm:$0x3] %vm84, %v76
    %86 = vst.msk [vmem:[#allocation2 + $0x2] sm:$0x3] %vm84, %v77
    %87 = vst.msk [vmem:[#allocation2 + $0x4] sm:$0x3] %vm84, %v78
    %88 = vst.msk [vmem:[#allocation2 + $0x6] sm:$0x3] %vm84, %v79
    %89 = vst.msk [vmem:[#allocation2 + $0x8] sm:$0x3] %vm84, %v80
    %90 = vst.msk [vmem:[#allocation2 + $0xa] sm:$0x3] %vm84, %v81
    %91 = vst.msk [vmem:[#allocation2 + $0xc] sm:$0x3] %vm84, %v82
    %92 = vst.msk [vmem:[#allocation2 + $0xe] sm:$0x3] %vm84, %v83
    // Predicated region
    $region10: #{tpu_custom_call.1} parent=1 // pred_check
      _
    $region11: #{tpu_custom_call.1} parent=1 // pred_check_branch
      %94 = sbr.rel (0) target = $region13
    $region12: #{tpu_custom_call.1} parent=1 // pred_region
      %s96 = ssub.s32 256, 256
      %97 = vsyncadd [#allocation3], %s96
      %s98 = sshll.u32 [#allocation2], 4
      %s99 = int_to_ptr.vmem [resolvable:$true] %s98
      %104 = dma.vmem_to_hbm [thread:$0]  %s99, 256, %s2, [#allocation3], 32, 32, 2
    $region13: #{tpu_custom_call.1} parent=1 // pred_fallthru
      _
    // Predicated region
    $region14: #{tpu_custom_call.1} parent=1 // pred_check
      _
    $region15: #{tpu_custom_call.1} parent=1 // pred_check_branch
      %106 = sbr.rel (0) target = $region17
    $region16: #{tpu_custom_call.1} parent=1 // pred_region
      %107 = dma.done [#allocation3], 256
    $region17: #{tpu_custom_call.1} parent=1 // pred_fallthru
      _
    %108 = vsyncpa [#allocation3], 1

</llo_original>
